<compile_context>
chip_gen: v6e
topology: v6e:2x2x1
jax: 0.10.0
libtpu: 0.0.40
codegen_flags: <defaults>
</compile_context>

<pallas_src>
import jax
import jax.numpy as jnp
from jax.experimental import pallas as pl
from jax.experimental.pallas import tpu as pltpu


def rnn_kernel(xw_ref, h0_ref, whh_ref, wl_ref, bl_ref, out_ref, hT_ref, y_scr):
    """Sequential tanh-RNN recurrence + batched output projection, one invocation.

    xw_ref : (T*B, H) f32  precomputed x_t @ W_ih^T + (b_ih + b_hh), rows ordered t*B + b
    h0_ref : (B, H)   f32  initial hidden state
    whh_ref: (H, H)   f32  W_hh^T
    wl_ref : (H, V)   f32  W_l^T
    bl_ref : (1, V)   f32  b_l
    out_ref: (T*B, V) f32  linear(y.reshape(-1, H))
    hT_ref : (B, H)   f32  final hidden state
    y_scr  : (T*B, H) f32  VMEM scratch collecting every h_t for the batched projection
    """
    B = h0_ref.shape[0]
    T = xw_ref.shape[0] // B

    def step(t, h_prev):
        r = pl.multiple_of(t * B, B)  # rows t*B : t*B + B (sublane-aligned)
        h = jnp.tanh(
            xw_ref[pl.ds(r, B), :]
            + jnp.dot(h_prev, whh_ref[...], preferred_element_type=jnp.float32)
        )
        y_scr[pl.ds(r, B), :] = h
        return h

    # Only the h_{t-1} @ W_hh^T chain is actually sequential; unroll it fully for
    # LLO scheduler visibility (T is a small static trip count).
    h_last = jax.lax.fori_loop(0, T, step, h0_ref[...], unroll=True)

    # Final hidden state: written exactly once, after the loop.
    hT_ref[...] = h_last

    # Batched output projection: one MXU matmul + one contiguous store for all T*B rows.
    out_ref[...] = (
        jnp.dot(y_scr[...], wl_ref[...], preferred_element_type=jnp.float32)
        + bl_ref[...]
    )


def my_rnn_forward(inputs, state, params, vocab_size):
    """Pallas equivalent of My_RNN.forward(inputs, state).

    inputs: (B, T) int32 token ids
    state : (1, B, H) f32 (num_directions * num_layers = 1)
    returns (out, new_state) with out: (T*B, V), new_state: (1, B, H)
    """
    B, T = inputs.shape
    H = params["W_hh"].shape[0]
    V = vocab_size

    # --- Non-recurrent input projection, hoisted out of the sequential loop. ---
    # F.one_hot(inputs.T, V).float() @ W_ih^T == row gather of W_ih^T by token id.
    # Rows are ordered t*B + b to match y.reshape(-1, H) in the PyTorch module.
    ids = inputs.T.reshape(-1)                                          # (T*B,)
    xw = (
        jnp.take(params["W_ih"].T.astype(jnp.float32), ids, axis=0)
        + (params["b_ih"] + params["b_hh"])[None, :]
    ).astype(jnp.float32)                                               # (T*B, H)

    h0 = state[0].astype(jnp.float32)                                   # (B, H)
    whh_t = params["W_hh"].T.astype(jnp.float32)                        # (H, H)
    wl_t = params["W_l"].T.astype(jnp.float32)                          # (H, V)
    bl = params["b_l"].reshape(1, V).astype(jnp.float32)                # (1, V)

    vmem = pl.BlockSpec(memory_space=pltpu.MemorySpace.VMEM)
    out, h_final = pl.pallas_call(
        rnn_kernel,
        out_shape=(
            jax.ShapeDtypeStruct((T * B, V), jnp.float32),
            jax.ShapeDtypeStruct((B, H), jnp.float32),
        ),
        in_specs=[vmem, vmem, vmem, vmem, vmem],
        out_specs=(vmem, vmem),
        scratch_shapes=[pltpu.VMEM((T * B, H), jnp.float32)],
    )(xw, h0, whh_t, wl_t, bl)

    return out, h_final[None]  # state shape (1, B, H)


def reference_forward(inputs, state, params, vocab_size):
    """Pure-JAX reference mirroring the PyTorch module's semantics."""
    x = jax.nn.one_hot(inputs.T, vocab_size, dtype=jnp.float32)  # (T, B, V)
    h0 = state[0]

    def step(h, xt):
        h_new = jnp.tanh(
            xt @ params["W_ih"].T + params["b_ih"]
            + h @ params["W_hh"].T + params["b_hh"]
        )
        return h_new, h_new

    hT, ys = jax.lax.scan(step, h0, x)            # ys: (T, B, H)
    y_flat = ys.reshape(-1, ys.shape[-1])
    out = y_flat @ params["W_l"].T + params["b_l"]
    return out, hT[None]


if __name__ == "__main__":
    # Small shapes consistent with the module: batch=8, seq=5, vocab=16, hidden=32.
    B, T, V, H = 8, 5, 16, 32

    key = jax.random.PRNGKey(0)
    k_in, k1, k2, k3, k4, k5, k6 = jax.random.split(key, 7)

    # Deterministic parameter init (PyTorch-style uniform(-1/sqrt(H), 1/sqrt(H))).
    s = 1.0 / jnp.sqrt(H)
    params = {
        "W_ih": jax.random.uniform(k1, (H, V), jnp.float32, -s, s),
        "W_hh": jax.random.uniform(k2, (H, H), jnp.float32, -s, s),
        "b_ih": jax.random.uniform(k3, (H,), jnp.float32, -s, s),
        "b_hh": jax.random.uniform(k4, (H,), jnp.float32, -s, s),
        "W_l":  jax.random.uniform(k5, (V, H), jnp.float32, -s, s),
        "b_l":  jax.random.uniform(k6, (V,), jnp.float32, -s, s),
    }

    inputs = jax.random.randint(k_in, (B, T), 0, V, dtype=jnp.int32)
    state = jnp.zeros((1, B, H), jnp.float32)   # begin_state for non-LSTM rnn

    out, new_state = my_rnn_forward(inputs, state, params, V)
    out = jax.block_until_ready(out)
    new_state = jax.block_until_ready(new_state)

    ref_out, ref_state = reference_forward(inputs, state, params, V)

    assert out.shape == (T * B, V) and new_state.shape == (1, B, H)
    assert jnp.allclose(out, ref_out, atol=1e-5, rtol=1e-5)
    assert jnp.allclose(new_state, ref_state, atol=1e-5, rtol=1e-5)

    print("KERNEL_OK")
</pallas_src>

<mosaic_0001>
module attributes {stable_mosaic.version = 11 : i64} {
  func.func @rnn_kernel(%arg0: memref<40x32xf32, #tpu.memory_space<vmem>>, %arg1: memref<8x32xf32, #tpu.memory_space<vmem>>, %arg2: memref<32x32xf32, #tpu.memory_space<vmem>>, %arg3: memref<32x16xf32, #tpu.memory_space<vmem>>, %arg4: memref<1x16xf32, #tpu.memory_space<vmem>>, %arg5: memref<40x16xf32, #tpu.memory_space<vmem>>, %arg6: memref<8x32xf32, #tpu.memory_space<vmem>>, %arg7: memref<40x32xf32, #tpu.memory_space<vmem>>) attributes {dimension_semantics = [], scalar_prefetch = 0 : i64, scratch_operands = 1 : i64, tpu.core_type = #tpu.core_type<tc>} {
    %c0 = arith.constant 0 : index
    %c0_0 = arith.constant 0 : index
    %0 = vector.load %arg1[%c0, %c0_0] : memref<8x32xf32, #tpu.memory_space<vmem>>, vector<8x32xf32>
    %c0_i32 = arith.constant 0 : i32
    %c8_i32 = arith.constant 8 : i32
    %1 = arith.muli %c0_i32, %c8_i32 : i32
    %2 = tpu.assume_multiple %1, 8 : i32
    %3 = arith.index_cast %2 : i32 to index
    %c0_1 = arith.constant 0 : index
    %4 = vector.load %arg0[%3, %c0_1] : memref<40x32xf32, #tpu.memory_space<vmem>>, vector<8x32xf32>
    %c0_2 = arith.constant 0 : index
    %c0_3 = arith.constant 0 : index
    %5 = vector.load %arg2[%c0_2, %c0_3] : memref<32x32xf32, #tpu.memory_space<vmem>>, vector<32x32xf32>
    %cst = arith.constant dense<0.000000e+00> : vector<8x32xf32>
    %6 = tpu.matmul %0, %5, %cst {dimension_numbers = #tpu.dot_dimension_numbers<[1], [0], [0], [1], [0, 0, 1, 1], [], []>} : vector<8x32xf32>, vector<32x32xf32>, vector<8x32xf32> -> vector<8x32xf32>
    %7 = arith.addf %4, %6 : vector<8x32xf32>
    %8 = math.tanh %7 : vector<8x32xf32>
    %9 = arith.index_cast %2 : i32 to index
    %c0_4 = arith.constant 0 : index
    %10 = vector.load %arg7[%9, %c0_4] : memref<40x32xf32, #tpu.memory_space<vmem>>, vector<8x32xf32>
    tpu.vector_store %arg7[%9, %c0_4], %8 {strides = array<i32>} : memref<40x32xf32, #tpu.memory_space<vmem>>, vector<8x32xf32>,
    %c1_i32 = arith.constant 1 : i32
    %c8_i32_5 = arith.constant 8 : i32
    %11 = arith.muli %c1_i32, %c8_i32_5 : i32
    %12 = tpu.assume_multiple %11, 8 : i32
    %13 = arith.index_cast %12 : i32 to index
    %c0_6 = arith.constant 0 : index
    %14 = vector.load %arg0[%13, %c0_6] : memref<40x32xf32, #tpu.memory_space<vmem>>, vector<8x32xf32>
    %c0_7 = arith.constant 0 : index
    %c0_8 = arith.constant 0 : index
    %15 = vector.load %arg2[%c0_7, %c0_8] : memref<32x32xf32, #tpu.memory_space<vmem>>, vector<32x32xf32>
    %cst_9 = arith.constant dense<0.000000e+00> : vector<8x32xf32>
    %16 = tpu.matmul %8, %15, %cst_9 {dimension_numbers = #tpu.dot_dimension_numbers<[1], [0], [0], [1], [0, 0, 1, 1], [], []>} : vector<8x32xf32>, vector<32x32xf32>, vector<8x32xf32> -> vector<8x32xf32>
    %17 = arith.addf %14, %16 : vector<8x32xf32>
    %18 = math.tanh %17 : vector<8x32xf32>
    %19 = arith.index_cast %12 : i32 to index
    %c0_10 = arith.constant 0 : index
    %20 = vector.load %arg7[%19, %c0_10] : memref<40x32xf32, #tpu.memory_space<vmem>>, vector<8x32xf32>
    tpu.vector_store %arg7[%19, %c0_10], %18 {strides = array<i32>} : memref<40x32xf32, #tpu.memory_space<vmem>>, vector<8x32xf32>,
    %c2_i32 = arith.constant 2 : i32
    %c8_i32_11 = arith.constant 8 : i32
    %21 = arith.muli %c2_i32, %c8_i32_11 : i32
    %22 = tpu.assume_multiple %21, 8 : i32
    %23 = arith.index_cast %22 : i32 to index
    %c0_12 = arith.constant 0 : index
    %24 = vector.load %arg0[%23, %c0_12] : memref<40x32xf32, #tpu.memory_space<vmem>>, vector<8x32xf32>
    %c0_13 = arith.constant 0 : index
    %c0_14 = arith.constant 0 : index
    %25 = vector.load %arg2[%c0_13, %c0_14] : memref<32x32xf32, #tpu.memory_space<vmem>>, vector<32x32xf32>
    %cst_15 = arith.constant dense<0.000000e+00> : vector<8x32xf32>
    %26 = tpu.matmul %18, %25, %cst_15 {dimension_numbers = #tpu.dot_dimension_numbers<[1], [0], [0], [1], [0, 0, 1, 1], [], []>} : vector<8x32xf32>, vector<32x32xf32>, vector<8x32xf32> -> vector<8x32xf32>
    %27 = arith.addf %24, %26 : vector<8x32xf32>
    %28 = math.tanh %27 : vector<8x32xf32>
    %29 = arith.index_cast %22 : i32 to index
    %c0_16 = arith.constant 0 : index
    %30 = vector.load %arg7[%29, %c0_16] : memref<40x32xf32, #tpu.memory_space<vmem>>, vector<8x32xf32>
    tpu.vector_store %arg7[%29, %c0_16], %28 {strides = array<i32>} : memref<40x32xf32, #tpu.memory_space<vmem>>, vector<8x32xf32>,
    %c3_i32 = arith.constant 3 : i32
    %c8_i32_17 = arith.constant 8 : i32
    %31 = arith.muli %c3_i32, %c8_i32_17 : i32
    %32 = tpu.assume_multiple %31, 8 : i32
    %33 = arith.index_cast %32 : i32 to index
    %c0_18 = arith.constant 0 : index
    %34 = vector.load %arg0[%33, %c0_18] : memref<40x32xf32, #tpu.memory_space<vmem>>, vector<8x32xf32>
    %c0_19 = arith.constant 0 : index
    %c0_20 = arith.constant 0 : index
    %35 = vector.load %arg2[%c0_19, %c0_20] : memref<32x32xf32, #tpu.memory_space<vmem>>, vector<32x32xf32>
    %cst_21 = arith.constant dense<0.000000e+00> : vector<8x32xf32>
    %36 = tpu.matmul %28, %35, %cst_21 {dimension_numbers = #tpu.dot_dimension_numbers<[1], [0], [0], [1], [0, 0, 1, 1], [], []>} : vector<8x32xf32>, vector<32x32xf32>, vector<8x32xf32> -> vector<8x32xf32>
    %37 = arith.addf %34, %36 : vector<8x32xf32>
    %38 = math.tanh %37 : vector<8x32xf32>
    %39 = arith.index_cast %32 : i32 to index
    %c0_22 = arith.constant 0 : index
    %40 = vector.load %arg7[%39, %c0_22] : memref<40x32xf32, #tpu.memory_space<vmem>>, vector<8x32xf32>
    tpu.vector_store %arg7[%39, %c0_22], %38 {strides = array<i32>} : memref<40x32xf32, #tpu.memory_space<vmem>>, vector<8x32xf32>,
    %c4_i32 = arith.constant 4 : i32
    %c8_i32_23 = arith.constant 8 : i32
    %41 = arith.muli %c4_i32, %c8_i32_23 : i32
    %42 = tpu.assume_multiple %41, 8 : i32
    %43 = arith.index_cast %42 : i32 to index
    %c0_24 = arith.constant 0 : index
    %44 = vector.load %arg0[%43, %c0_24] : memref<40x32xf32, #tpu.memory_space<vmem>>, vector<8x32xf32>
    %c0_25 = arith.constant 0 : index
    %c0_26 = arith.constant 0 : index
    %45 = vector.load %arg2[%c0_25, %c0_26] : memref<32x32xf32, #tpu.memory_space<vmem>>, vector<32x32xf32>
    %cst_27 = arith.constant dense<0.000000e+00> : vector<8x32xf32>
    %46 = tpu.matmul %38, %45, %cst_27 {dimension_numbers = #tpu.dot_dimension_numbers<[1], [0], [0], [1], [0, 0, 1, 1], [], []>} : vector<8x32xf32>, vector<32x32xf32>, vector<8x32xf32> -> vector<8x32xf32>
    %47 = arith.addf %44, %46 : vector<8x32xf32>
    %48 = math.tanh %47 : vector<8x32xf32>
    %49 = arith.index_cast %42 : i32 to index
    %c0_28 = arith.constant 0 : index
    %50 = vector.load %arg7[%49, %c0_28] : memref<40x32xf32, #tpu.memory_space<vmem>>, vector<8x32xf32>
    tpu.vector_store %arg7[%49, %c0_28], %48 {strides = array<i32>} : memref<40x32xf32, #tpu.memory_space<vmem>>, vector<8x32xf32>,
    %c5_i32 = arith.constant 5 : i32
    %c0_29 = arith.constant 0 : index
    %c0_30 = arith.constant 0 : index
    %51 = vector.load %arg6[%c0_29, %c0_30] : memref<8x32xf32, #tpu.memory_space<vmem>>, vector<8x32xf32>
    tpu.vector_store %arg6[%c0_29, %c0_30], %48 {strides = array<i32>} : memref<8x32xf32, #tpu.memory_space<vmem>>, vector<8x32xf32>,
    %c0_31 = arith.constant 0 : index
    %c0_32 = arith.constant 0 : index
    %52 = vector.load %arg7[%c0_31, %c0_32] : memref<40x32xf32, #tpu.memory_space<vmem>>, vector<40x32xf32>
    %c0_33 = arith.constant 0 : index
    %c0_34 = arith.constant 0 : index
    %53 = vector.load %arg3[%c0_33, %c0_34] : memref<32x16xf32, #tpu.memory_space<vmem>>, vector<32x16xf32>
    %cst_35 = arith.constant dense<0.000000e+00> : vector<40x16xf32>
    %54 = tpu.matmul %52, %53, %cst_35 {dimension_numbers = #tpu.dot_dimension_numbers<[1], [0], [0], [1], [0, 0, 1, 1], [], []>} : vector<40x32xf32>, vector<32x16xf32>, vector<40x16xf32> -> vector<40x16xf32>
    %c0_36 = arith.constant 0 : index
    %c0_37 = arith.constant 0 : index
    %55 = vector.load %arg4[%c0_36, %c0_37] : memref<1x16xf32, #tpu.memory_space<vmem>>, vector<1x16xf32>
    %56 = vector.broadcast %55 : vector<1x16xf32> to vector<40x16xf32>
    %57 = arith.addf %54, %56 : vector<40x16xf32>
    %c0_38 = arith.constant 0 : index
    %c0_39 = arith.constant 0 : index
    %58 = vector.load %arg5[%c0_38, %c0_39] : memref<40x16xf32, #tpu.memory_space<vmem>>, vector<40x16xf32>
    tpu.vector_store %arg5[%c0_38, %c0_39], %57 {strides = array<i32>} : memref<40x16xf32, #tpu.memory_space<vmem>>, vector<40x16xf32>,
    return
  }
}

</mosaic_0001>

<llo_original>
// kernel: tpu_custom_call.1
$region0: #{tpu_custom_call.1}
  #allocation0 [shape = 'u32[]', space=smem, size = 0x4, offset = 0x4, fixed_abs, tag = 'smem constant byte address 0x4 - core index']
  #allocation1 [shape = 'u32[144,128]{1,0:T(1,128)}', space=vmem, size = 0x12000, scoped, tag = 'internal scratch']
  #allocation2 [shape = 'f32[40,32]{1,0:T(8,128)}', space=vmem, size = 0x5000, scoped, tag = 'scratch operand']
  %s0 = inlined_call_operand.vmem [shape: f32[40,32], index: 0, kind: input, shape index: {}]
  %s1 = inlined_call_operand.vmem [shape: f32[8,32], index: 1, kind: input, shape index: {}]
  %s2 = inlined_call_operand.vmem [shape: f32[32,32], index: 2, kind: input, shape index: {}]
  %s3 = inlined_call_operand.vmem [shape: f32[32,16], index: 3, kind: input, shape index: {}]
  %s4 = inlined_call_operand.vmem [shape: f32[1,16], index: 4, kind: input, shape index: {}]
  %s5 = inlined_call_operand.vmem [shape: f32[40,16], index: 5, kind: output, shape index: {0}]
  %s6 = inlined_call_operand.hbm [shape: f32[8,32], index: 6, kind: output, shape index: {1}]
  %7 = xla_tuple %s5, %s6
  %s8 = sld [smem:[#allocation0]]
  $region38: #{tpu_custom_call.1} parent=0
    _
  %s10 = ssub.s32 1, %s8
  %s11 = scalar_select 0, %s10, %s8
  $region1: #{tpu_custom_call.1} parent=0
    #allocation3 [shape = 'u8[4096]{0}', space=vmem, size = 0x1000, scoped, tag = 'output window, operand 1, single buffered']
    #allocation4 [shape = 's32[1]{0}', space=sflag, size = 0x4, scoped, tag = 'scoped memory for tpu_custom_call.1']
    %12 = vsyncpa [#allocation4], 0
    // Predicated region
    $region2: #{tpu_custom_call.1} parent=1 // pred_check
      _
    $region3: #{tpu_custom_call.1} parent=1 // pred_check_branch
      %14 = sbr.rel (0) target = $region5
    $region4: #{tpu_custom_call.1} parent=1 // pred_region
      _
    $region5: #{tpu_custom_call.1} parent=1 // pred_fallthru
      _
    // Predicated region
    $region6: #{tpu_custom_call.1} parent=1 // pred_check
      _
    $region7: #{tpu_custom_call.1} parent=1 // pred_check_branch
      %16 = sbr.rel (0) target = $region9
    $region8: #{tpu_custom_call.1} parent=1 // pred_region
      _
    $region9: #{tpu_custom_call.1} parent=1 // pred_fallthru
      _
    // Predicated region
    $region10: #{tpu_custom_call.1} parent=1 // pred_check
      _
    $region11: #{tpu_custom_call.1} parent=1 // pred_check_branch
      %18 = sbr.rel (0) target = $region13
    $region12: #{tpu_custom_call.1} parent=1 // pred_region
      _
    $region13: #{tpu_custom_call.1} parent=1 // pred_fallthru
      _
    // Predicated region
    $region14: #{tpu_custom_call.1} parent=1 // pred_check
      _
    $region15: #{tpu_custom_call.1} parent=1 // pred_check_branch
      %20 = sbr.rel (0) target = $region17
    $region16: #{tpu_custom_call.1} parent=1 // pred_region
      _
    $region17: #{tpu_custom_call.1} parent=1 // pred_fallthru
      _
    // Predicated region
    $region18: #{tpu_custom_call.1} parent=1 // pred_check
      _
    $region19: #{tpu_custom_call.1} parent=1 // pred_check_branch
      %22 = sbr.rel (0) target = $region21
    $region20: #{tpu_custom_call.1} parent=1 // pred_region
      _
    $region21: #{tpu_custom_call.1} parent=1 // pred_fallthru
      _
    %v23 = vld [vmem:[%s1] sm:$0xff]
    %v24 = vld [vmem:[%s0] sm:$0xff]
    %v25 = vld [vmem:[%s2] sm:$0xff]
    %v26 = vld [vmem:[%s2 + $0x8] sm:$0xff]
    %v27 = vld [vmem:[%s2 + $0x10] sm:$0xff]
    %v28 = vld [vmem:[%s2 + $0x18] sm:$0xff]
    %vm29 = vcmask 261120
    %v31 = vsel %vm29, %v23, 0
    %33 = vmatprep.subr.mxu0 0.0
    %34 = vmatpush1.msra.mxu0 0.0
    %35 = vmatprep.subr.mxu0 0.0
    %36 = vmatpush1.msra.mxu0 0.0
    %37 = vmatprep.subr.mxu0 0.0
    %38 = vmatpush1.msra.mxu0 0.0
    %39 = vmatprep.subr.mxu0 0.0
    %40 = vmatpush1.msra.mxu0 0.0
    %41 = vmatprep.subr.mxu0 0.0
    %42 = vmatpush1.msra.mxu0 0.0
    %43 = vmatprep.subr.mxu0 0.0
    %44 = vmatpush1.msra.mxu0 0.0
    %45 = vmatprep.subr.mxu0 0.0
    %46 = vmatpush1.msra.mxu0 0.0
    %47 = vmatprep.subr.mxu0 0.0
    %48 = vmatpush1.msra.mxu0 0.0
    %49 = vmatprep.subr.mxu0 0.0
    %50 = vmatpush1.msra.mxu0 0.0
    %51 = vmatprep.subr.mxu0 0.0
    %52 = vmatpush1.msra.mxu0 0.0
    %53 = vmatprep.subr.mxu0 0.0
    %54 = vmatpush1.msra.mxu0 0.0
    %55 = vmatprep.subr.mxu0 0.0
    %56 = vmatpush1.msra.mxu0 0.0
    %57 = vmatprep.subr.mxu0 0.0
    %58 = vmatpush1.msra.mxu0 %v28
    %59 = vmatprep.subr.mxu0 0.0
    %60 = vmatpush1.msra.mxu0 %v27
    %61 = vmatprep.subr.mxu0 0.0
    %62 = vmatpush1.msra.mxu0 %v26
    %63 = vmatprep.subr.mxu0 0.0
    %64 = vmatpush1.msra.mxu0 %v25
    %65 = vmatprep.subr.mxu0 0.0
    %66 = vmatpush2.msra.mxu0 0.0
    %67 = vmatprep.subr.mxu0 0.0
    %68 = vmatpush2.msra.mxu0 0.0
    %69 = vmatprep.subr.mxu0 0.0
    %70 = vmatpush2.msra.mxu0 0.0
    %71 = vmatprep.subr.mxu0 0.0
    %72 = vmatpush2.msra.mxu0 0.0
    %73 = vmatprep.subr.mxu0 0.0
    %74 = vmatpush2.msra.mxu0 0.0
    %75 = vmatprep.subr.mxu0 0.0
    %76 = vmatpush2.msra.mxu0 0.0
    %77 = vmatprep.subr.mxu0 0.0
    %78 = vmatpush2.msra.mxu0 0.0
    %79 = vmatprep.subr.mxu0 0.0
    %80 = vmatpush2.msra.mxu0 0.0
    %81 = vmatprep.subr.mxu0 0.0
    %82 = vmatpush2.msra.mxu0 0.0
    %83 = vmatprep.subr.mxu0 0.0
    %84 = vmatpush2.msra.mxu0 0.0
    %85 = vmatprep.subr.mxu0 0.0
    %86 = vmatpush2.msra.mxu0 0.0
    %87 = vmatprep.subr.mxu0 0.0
    %88 = vmatpush2.msra.mxu0 0.0
    %89 = vmatprep.subr.mxu0 0.0
    %90 = vmatpush2.msra.mxu0 0.0
    %91 = vmatprep.subr.mxu0 0.0
    %92 = vmatpush2.msra.mxu0 0.0
    %93 = vmatprep.subr.mxu0 0.0
    %94 = vmatpush2.msra.mxu0 0.0
    %95 = vmatprep.subr.mxu0 0.0
    %96 = vmatpush2.msra.mxu0 0.0
    %97 = vmatprep.mubr.f32.mxu0 0.0
    %98 = vmatmul.mubr.f32.gmra.mxu0 %v31
    %v99 = vpop.f32.mrf.mxu0
    %v100 = vadd.f32 0.0, %v99
    %v101 = vpop.f32.mrf.mxu0
    %102 = vdwg.mxu0
    %v103 = vadd.f32 %v24, %v100
    %v104 = vtanh.pop %v103
    %105 = vst.msk [vmem:[#allocation2] sm:$0xff] %vm29, %v104
    %s106 = scalar_lea.vmem %s0, 8
    %v107 = vld [vmem:[%s106] sm:$0xff]
    %v108 = vld [vmem:[%s2] sm:$0xff]
    %v109 = vld [vmem:[%s2 + $0x8] sm:$0xff]
    %v110 = vld [vmem:[%s2 + $0x10] sm:$0xff]
    %v111 = vld [vmem:[%s2 + $0x18] sm:$0xff]
    %v113 = vsel %vm29, %v104, 0
    %115 = vmatprep.subr.mxu0 0.0
    %116 = vmatpush1.msra.mxu0 0.0
    %117 = vmatprep.subr.mxu0 0.0
    %118 = vmatpush1.msra.mxu0 0.0
    %119 = vmatprep.subr.mxu0 0.0
    %120 = vmatpush1.msra.mxu0 0.0
    %121 = vmatprep.subr.mxu0 0.0
    %122 = vmatpush1.msra.mxu0 0.0
    %123 = vmatprep.subr.mxu0 0.0
    %124 = vmatpush1.msra.mxu0 0.0
    %125 = vmatprep.subr.mxu0 0.0
    %126 = vmatpush1.msra.mxu0 0.0
    %127 = vmatprep.subr.mxu0 0.0
    %128 = vmatpush1.msra.mxu0 0.0
    %129 = vmatprep.subr.mxu0 0.0
    %130 = vmatpush1.msra.mxu0 0.0
    %131 = vmatprep.subr.mxu0 0.0
    %132 = vmatpush1.msra.mxu0 0.0
    %133 = vmatprep.subr.mxu0 0.0
    %134 = vmatpush1.msra.mxu0 0.0
    %135 = vmatprep.subr.mxu0 0.0
    %136 = vmatpush1.msra.mxu0 0.0
    %137 = vmatprep.subr.mxu0 0.0
    %138 = vmatpush1.msra.mxu0 0.0
    %139 = vmatprep.subr.mxu0 0.0
    %140 = vmatpush1.msra.mxu0 %v111
    %141 = vmatprep.subr.mxu0 0.0
    %142 = vmatpush1.msra.mxu0 %v110
    %143 = vmatprep.subr.mxu0 0.0
    %144 = vmatpush1.msra.mxu0 %v109
    %145 = vmatprep.subr.mxu0 0.0
    %146 = vmatpush1.msra.mxu0 %v108
    %147 = vmatprep.subr.mxu0 0.0
    %148 = vmatpush2.msra.mxu0 0.0
    %149 = vmatprep.subr.mxu0 0.0
    %150 = vmatpush2.msra.mxu0 0.0
    %151 = vmatprep.subr.mxu0 0.0
    %152 = vmatpush2.msra.mxu0 0.0
    %153 = vmatprep.subr.mxu0 0.0
    %154 = vmatpush2.msra.mxu0 0.0
    %155 = vmatprep.subr.mxu0 0.0
    %156 = vmatpush2.msra.mxu0 0.0
    %157 = vmatprep.subr.mxu0 0.0
    %158 = vmatpush2.msra.mxu0 0.0
    %159 = vmatprep.subr.mxu0 0.0
    %160 = vmatpush2.msra.mxu0 0.0
    %161 = vmatprep.subr.mxu0 0.0
    %162 = vmatpush2.msra.mxu0 0.0
    %163 = vmatprep.subr.mxu0 0.0
    %164 = vmatpush2.msra.mxu0 0.0
    %165 = vmatprep.subr.mxu0 0.0
    %166 = vmatpush2.msra.mxu0 0.0
    %167 = vmatprep.subr.mxu0 0.0
    %168 = vmatpush2.msra.mxu0 0.0
    %169 = vmatprep.subr.mxu0 0.0
    %170 = vmatpush2.msra.mxu0 0.0
    %171 = vmatprep.subr.mxu0 0.0
    %172 = vmatpush2.msra.mxu0 0.0
    %173 = vmatprep.subr.mxu0 0.0
    %174 = vmatpush2.msra.mxu0 0.0
    %175 = vmatprep.subr.mxu0 0.0
    %176 = vmatpush2.msra.mxu0 0.0
    %177 = vmatprep.subr.mxu0 0.0
    %178 = vmatpush2.msra.mxu0 0.0
    %179 = vmatprep.mubr.f32.mxu0 0.0
    %180 = vmatmul.mubr.f32.gmra.mxu0 %v113
    %v181 = vpop.f32.mrf.mxu0
    %v182 = vadd.f32 0.0, %v181
    %v183 = vpop.f32.mrf.mxu0
    %184 = vdwg.mxu0
    %v185 = vadd.f32 %v107, %v182
    %v186 = vtanh.pop %v185
    %s187 = scalar_lea.vmem [#allocation2], 8
    %188 = vst.msk [vmem:[%s187] sm:$0xff] %vm29, %v186
    %s189 = scalar_lea.vmem %s0, 16
    %v190 = vld [vmem:[%s189] sm:$0xff]
    %v191 = vld [vmem:[%s2] sm:$0xff]
    %v192 = vld [vmem:[%s2 + $0x8] sm:$0xff]
    %v193 = vld [vmem:[%s2 + $0x10] sm:$0xff]
    %v194 = vld [vmem:[%s2 + $0x18] sm:$0xff]
    %v196 = vsel %vm29, %v186, 0
    %198 = vmatprep.subr.mxu0 0.0
    %199 = vmatpush1.msra.mxu0 0.0
    %200 = vmatprep.subr.mxu0 0.0
    %201 = vmatpush1.msra.mxu0 0.0
    %202 = vmatprep.subr.mxu0 0.0
    %203 = vmatpush1.msra.mxu0 0.0
    %204 = vmatprep.subr.mxu0 0.0
    %205 = vmatpush1.msra.mxu0 0.0
    %206 = vmatprep.subr.mxu0 0.0
    %207 = vmatpush1.msra.mxu0 0.0
    %208 = vmatprep.subr.mxu0 0.0
    %209 = vmatpush1.msra.mxu0 0.0
    %210 = vmatprep.subr.mxu0 0.0
    %211 = vmatpush1.msra.mxu0 0.0
    %212 = vmatprep.subr.mxu0 0.0
    %213 = vmatpush1.msra.mxu0 0.0
    %214 = vmatprep.subr.mxu0 0.0
    %215 = vmatpush1.msra.mxu0 0.0
    %216 = vmatprep.subr.mxu0 0.0
    %217 = vmatpush1.msra.mxu0 0.0
    %218 = vmatprep.subr.mxu0 0.0
    %219 = vmatpush1.msra.mxu0 0.0
    %220 = vmatprep.subr.mxu0 0.0
    %221 = vmatpush1.msra.mxu0 0.0
    %222 = vmatprep.subr.mxu0 0.0
    %223 = vmatpush1.msra.mxu0 %v194
    %224 = vmatprep.subr.mxu0 0.0
    %225 = vmatpush1.msra.mxu0 %v193
    %226 = vmatprep.subr.mxu0 0.0
    %227 = vmatpush1.msra.mxu0 %v192
    %228 = vmatprep.subr.mxu0 0.0
    %229 = vmatpush1.msra.mxu0 %v191
    %230 = vmatprep.subr.mxu0 0.0
    %231 = vmatpush2.msra.mxu0 0.0
    %232 = vmatprep.subr.mxu0 0.0
    %233 = vmatpush2.msra.mxu0 0.0
    %234 = vmatprep.subr.mxu0 0.0
    %235 = vmatpush2.msra.mxu0 0.0
    %236 = vmatprep.subr.mxu0 0.0
    %237 = vmatpush2.msra.mxu0 0.0
    %238 = vmatprep.subr.mxu0 0.0
    %239 = vmatpush2.msra.mxu0 0.0
    %240 = vmatprep.subr.mxu0 0.0
    %241 = vmatpush2.msra.mxu0 0.0
    %242 = vmatprep.subr.mxu0 0.0
    %243 = vmatpush2.msra.mxu0 0.0
    %244 = vmatprep.subr.mxu0 0.0
    %245 = vmatpush2.msra.mxu0 0.0
    %246 = vmatprep.subr.mxu0 0.0
    %247 = vmatpush2.msra.mxu0 0.0
    %248 = vmatprep.subr.mxu0 0.0
    %249 = vmatpush2.msra.mxu0 0.0
    %250 = vmatprep.subr.mxu0 0.0
    %251 = vmatpush2.msra.mxu0 0.0
    %252 = vmatprep.subr.mxu0 0.0
    %253 = vmatpush2.msra.mxu0 0.0
    %254 = vmatprep.subr.mxu0 0.0
    %255 = vmatpush2.msra.mxu0 0.0
    %256 = vmatprep.subr.mxu0 0.0
    %257 = vmatpush2.msra.mxu0 0.0
    %258 = vmatprep.subr.mxu0 0.0
    %259 = vmatpush2.msra.mxu0 0.0
    %260 = vmatprep.subr.mxu0 0.0
    %261 = vmatpush2.msra.mxu0 0.0
    %262 = vmatprep.mubr.f32.mxu0 0.0
    %263 = vmatmul.mubr.f32.gmra.mxu0 %v196
    %v264 = vpop.f32.mrf.mxu0
    %v265 = vadd.f32 0.0, %v264
    %v266 = vpop.f32.mrf.mxu0
    %267 = vdwg.mxu0
    %v268 = vadd.f32 %v190, %v265
    %v269 = vtanh.pop %v268
    %s270 = scalar_lea.vmem [#allocation2], 16
    %271 = vst.msk [vmem:[%s270] sm:$0xff] %vm29, %v269
    %s272 = scalar_lea.vmem %s0, 24
    %v273 = vld [vmem:[%s272] sm:$0xff]
    %v274 = vld [vmem:[%s2] sm:$0xff]
    %v275 = vld [vmem:[%s2 + $0x8] sm:$0xff]
    %v276 = vld [vmem:[%s2 + $0x10] sm:$0xff]
    %v277 = vld [vmem:[%s2 + $0x18] sm:$0xff]
    %v279 = vsel %vm29, %v269, 0
    %281 = vmatprep.subr.mxu0 0.0
    %282 = vmatpush1.msra.mxu0 0.0
    %283 = vmatprep.subr.mxu0 0.0
    %284 = vmatpush1.msra.mxu0 0.0
    %285 = vmatprep.subr.mxu0 0.0
    %286 = vmatpush1.msra.mxu0 0.0
    %287 = vmatprep.subr.mxu0 0.0
    %288 = vmatpush1.msra.mxu0 0.0
    %289 = vmatprep.subr.mxu0 0.0
    %290 = vmatpush1.msra.mxu0 0.0
    %291 = vmatprep.subr.mxu0 0.0
    %292 = vmatpush1.msra.mxu0 0.0
    %293 = vmatprep.subr.mxu0 0.0
    %294 = vmatpush1.msra.mxu0 0.0
    %295 = vmatprep.subr.mxu0 0.0
    %296 = vmatpush1.msra.mxu0 0.0
    %297 = vmatprep.subr.mxu0 0.0
    %298 = vmatpush1.msra.mxu0 0.0
    %299 = vmatprep.subr.mxu0 0.0
    %300 = vmatpush1.msra.mxu0 0.0
    %301 = vmatprep.subr.mxu0 0.0
    %302 = vmatpush1.msra.mxu0 0.0
    %303 = vmatprep.subr.mxu0 0.0
    %304 = vmatpush1.msra.mxu0 0.0
    %305 = vmatprep.subr.mxu0 0.0
    %306 = vmatpush1.msra.mxu0 %v277
    %307 = vmatprep.subr.mxu0 0.0
    %308 = vmatpush1.msra.mxu0 %v276
    %309 = vmatprep.subr.mxu0 0.0
    %310 = vmatpush1.msra.mxu0 %v275
    %311 = vmatprep.subr.mxu0 0.0
    %312 = vmatpush1.msra.mxu0 %v274
    %313 = vmatprep.subr.mxu0 0.0
    %314 = vmatpush2.msra.mxu0 0.0
    %315 = vmatprep.subr.mxu0 0.0
    %316 = vmatpush2.msra.mxu0 0.0
    %317 = vmatprep.subr.mxu0 0.0
    %318 = vmatpush2.msra.mxu0 0.0
    %319 = vmatprep.subr.mxu0 0.0
    %320 = vmatpush2.msra.mxu0 0.0
    %321 = vmatprep.subr.mxu0 0.0
    %322 = vmatpush2.msra.mxu0 0.0
    %323 = vmatprep.subr.mxu0 0.0
    %324 = vmatpush2.msra.mxu0 0.0
    %325 = vmatprep.subr.mxu0 0.0
    %326 = vmatpush2.msra.mxu0 0.0
    %327 = vmatprep.subr.mxu0 0.0
    %328 = vmatpush2.msra.mxu0 0.0
    %329 = vmatprep.subr.mxu0 0.0
    %330 = vmatpush2.msra.mxu0 0.0
    %331 = vmatprep.subr.mxu0 0.0
    %332 = vmatpush2.msra.mxu0 0.0
    %333 = vmatprep.subr.mxu0 0.0
    %334 = vmatpush2.msra.mxu0 0.0
    %335 = vmatprep.subr.mxu0 0.0
    %336 = vmatpush2.msra.mxu0 0.0
    %337 = vmatprep.subr.mxu0 0.0
    %338 = vmatpush2.msra.mxu0 0.0
    %339 = vmatprep.subr.mxu0 0.0
    %340 = vmatpush2.msra.mxu0 0.0
    %341 = vmatprep.subr.mxu0 0.0
    %342 = vmatpush2.msra.mxu0 0.0
    %343 = vmatprep.subr.mxu0 0.0
    %344 = vmatpush2.msra.mxu0 0.0
    %345 = vmatprep.mubr.f32.mxu0 0.0
    %346 = vmatmul.mubr.f32.gmra.mxu0 %v279
    %v347 = vpop.f32.mrf.mxu0
    %v348 = vadd.f32 0.0, %v347
    %v349 = vpop.f32.mrf.mxu0
    %350 = vdwg.mxu0
    %v351 = vadd.f32 %v273, %v348
    %v352 = vtanh.pop %v351
    %s353 = scalar_lea.vmem [#allocation2], 24
    %354 = vst.msk [vmem:[%s353] sm:$0xff] %vm29, %v352
    %s355 = scalar_lea.vmem %s0, 32
    %v356 = vld [vmem:[%s355] sm:$0xff]
    %v357 = vld [vmem:[%s2] sm:$0xff]
    %v358 = vld [vmem:[%s2 + $0x8] sm:$0xff]
    %v359 = vld [vmem:[%s2 + $0x10] sm:$0xff]
    %v360 = vld [vmem:[%s2 + $0x18] sm:$0xff]
    %v362 = vsel %vm29, %v352, 0
    %364 = vmatprep.subr.mxu0 0.0
    %365 = vmatpush1.msra.mxu0 0.0
    %366 = vmatprep.subr.mxu0 0.0
    %367 = vmatpush1.msra.mxu0 0.0
    %368 = vmatprep.subr.mxu0 0.0
    %369 = vmatpush1.msra.mxu0 0.0
    %370 = vmatprep.subr.mxu0 0.0
    %371 = vmatpush1.msra.mxu0 0.0
    %372 = vmatprep.subr.mxu0 0.0
    %373 = vmatpush1.msra.mxu0 0.0
    %374 = vmatprep.subr.mxu0 0.0
    %375 = vmatpush1.msra.mxu0 0.0
    %376 = vmatprep.subr.mxu0 0.0
    %377 = vmatpush1.msra.mxu0 0.0
    %378 = vmatprep.subr.mxu0 0.0
    %379 = vmatpush1.msra.mxu0 0.0
    %380 = vmatprep.subr.mxu0 0.0
    %381 = vmatpush1.msra.mxu0 0.0
    %382 = vmatprep.subr.mxu0 0.0
    %383 = vmatpush1.msra.mxu0 0.0
    %384 = vmatprep.subr.mxu0 0.0
    %385 = vmatpush1.msra.mxu0 0.0
    %386 = vmatprep.subr.mxu0 0.0
    %387 = vmatpush1.msra.mxu0 0.0
    %388 = vmatprep.subr.mxu0 0.0
    %389 = vmatpush1.msra.mxu0 %v360
    %390 = vmatprep.subr.mxu0 0.0
    %391 = vmatpush1.msra.mxu0 %v359
    %392 = vmatprep.subr.mxu0 0.0
    %393 = vmatpush1.msra.mxu0 %v358
    %394 = vmatprep.subr.mxu0 0.0
    %395 = vmatpush1.msra.mxu0 %v357
    %396 = vmatprep.subr.mxu0 0.0
    %397 = vmatpush2.msra.mxu0 0.0
    %398 = vmatprep.subr.mxu0 0.0
    %399 = vmatpush2.msra.mxu0 0.0
    %400 = vmatprep.subr.mxu0 0.0
    %401 = vmatpush2.msra.mxu0 0.0
    %402 = vmatprep.subr.mxu0 0.0
    %403 = vmatpush2.msra.mxu0 0.0
    %404 = vmatprep.subr.mxu0 0.0
    %405 = vmatpush2.msra.mxu0 0.0
    %406 = vmatprep.subr.mxu0 0.0
    %407 = vmatpush2.msra.mxu0 0.0
    %408 = vmatprep.subr.mxu0 0.0
    %409 = vmatpush2.msra.mxu0 0.0
    %410 = vmatprep.subr.mxu0 0.0
    %411 = vmatpush2.msra.mxu0 0.0
    %412 = vmatprep.subr.mxu0 0.0
    %413 = vmatpush2.msra.mxu0 0.0
    %414 = vmatprep.subr.mxu0 0.0
    %415 = vmatpush2.msra.mxu0 0.0
    %416 = vmatprep.subr.mxu0 0.0
    %417 = vmatpush2.msra.mxu0 0.0
    %418 = vmatprep.subr.mxu0 0.0
    %419 = vmatpush2.msra.mxu0 0.0
    %420 = vmatprep.subr.mxu0 0.0
    %421 = vmatpush2.msra.mxu0 0.0
    %422 = vmatprep.subr.mxu0 0.0
    %423 = vmatpush2.msra.mxu0 0.0
    %424 = vmatprep.subr.mxu0 0.0
    %425 = vmatpush2.msra.mxu0 0.0
    %426 = vmatprep.subr.mxu0 0.0
    %427 = vmatpush2.msra.mxu0 0.0
    %428 = vmatprep.mubr.f32.mxu0 0.0
    %429 = vmatmul.mubr.f32.gmra.mxu0 %v362
    %v430 = vpop.f32.mrf.mxu0
    %v431 = vadd.f32 0.0, %v430
    %v432 = vpop.f32.mrf.mxu0
    %433 = vdwg.mxu0
    %v434 = vadd.f32 %v356, %v431
    %v435 = vtanh.pop %v434
    %s436 = scalar_lea.vmem [#allocation2], 32
    %437 = vst.msk [vmem:[%s436] sm:$0xff] %vm29, %v435
    %438 = vst.msk [vmem:[#allocation3] sm:$0xff] %vm29, %v435
    %v439 = vld [vmem:[#allocation2] sm:$0xff]
    %v440 = vld [vmem:[#allocation2 + $0x8] sm:$0xff]
    %v441 = vld [vmem:[#allocation2 + $0x10] sm:$0xff]
    %v442 = vld [vmem:[#allocation2 + $0x18] sm:$0xff]
    %v443 = vld [vmem:[#allocation2 + $0x20] sm:$0xff]
    %v444 = vld [vmem:[%s3] sm:$0xff]
    %v445 = vld [vmem:[%s3 + $0x8] sm:$0xff]
    %v446 = vld [vmem:[%s3 + $0x10] sm:$0xff]
    %v447 = vld [vmem:[%s3 + $0x18] sm:$0xff]
    %v448 = vld [vmem:[%s4] sm:$0x1]
    %v450 = vlaneseq
    %v451 = vshrl.u32 %v450, 7
    %v452 = vsub.s32 0, %v451
    %v453 = vrot.slane %v448, %v452
    %v456 = vsel %vm29, %v439, 0
    %v459 = vsel %vm29, %v440, 0
    %v462 = vsel %vm29, %v441, 0
    %v465 = vsel %vm29, %v442, 0
    %v468 = vsel %vm29, %v443, 0
    %470 = vmatprep.subr.mxu0 0.0
    %471 = vmatpush1.msra.mxu0 0.0
    %472 = vmatprep.subr.mxu0 0.0
    %473 = vmatpush1.msra.mxu0 0.0
    %474 = vmatprep.subr.mxu0 0.0
    %475 = vmatpush1.msra.mxu0 0.0
    %476 = vmatprep.subr.mxu0 0.0
    %477 = vmatpush1.msra.mxu0 0.0
    %478 = vmatprep.subr.mxu0 0.0
    %479 = vmatpush1.msra.mxu0 0.0
    %480 = vmatprep.subr.mxu0 0.0
    %481 = vmatpush1.msra.mxu0 0.0
    %482 = vmatprep.subr.mxu0 0.0
    %483 = vmatpush1.msra.mxu0 0.0
    %484 = vmatprep.subr.mxu0 0.0
    %485 = vmatpush1.msra.mxu0 0.0
    %486 = vmatprep.subr.mxu0 0.0
    %487 = vmatpush1.msra.mxu0 0.0
    %488 = vmatprep.subr.mxu0 0.0
    %489 = vmatpush1.msra.mxu0 0.0
    %490 = vmatprep.subr.mxu0 0.0
    %491 = vmatpush1.msra.mxu0 0.0
    %492 = vmatprep.subr.mxu0 0.0
    %493 = vmatpush1.msra.mxu0 0.0
    %494 = vmatprep.subr.mxu0 0.0
    %495 = vmatpush1.msra.mxu0 %v447
    %496 = vmatprep.subr.mxu0 0.0
    %497 = vmatpush1.msra.mxu0 %v446
    %498 = vmatprep.subr.mxu0 0.0
    %499 = vmatpush1.msra.mxu0 %v445
    %500 = vmatprep.subr.mxu0 0.0
    %501 = vmatpush1.msra.mxu0 %v444
    %502 = vmatprep.subr.mxu0 0.0
    %503 = vmatpush2.msra.mxu0 0.0
    %504 = vmatprep.subr.mxu0 0.0
    %505 = vmatpush2.msra.mxu0 0.0
    %506 = vmatprep.subr.mxu0 0.0
    %507 = vmatpush2.msra.mxu0 0.0
    %508 = vmatprep.subr.mxu0 0.0
    %509 = vmatpush2.msra.mxu0 0.0
    %510 = vmatprep.subr.mxu0 0.0
    %511 = vmatpush2.msra.mxu0 0.0
    %512 = vmatprep.subr.mxu0 0.0
    %513 = vmatpush2.msra.mxu0 0.0
    %514 = vmatprep.subr.mxu0 0.0
    %515 = vmatpush2.msra.mxu0 0.0
    %516 = vmatprep.subr.mxu0 0.0
    %517 = vmatpush2.msra.mxu0 0.0
    %518 = vmatprep.subr.mxu0 0.0
    %519 = vmatpush2.msra.mxu0 0.0
    %520 = vmatprep.subr.mxu0 0.0
    %521 = vmatpush2.msra.mxu0 0.0
    %522 = vmatprep.subr.mxu0 0.0
    %523 = vmatpush2.msra.mxu0 0.0
    %524 = vmatprep.subr.mxu0 0.0
    %525 = vmatpush2.msra.mxu0 0.0
    %526 = vmatprep.subr.mxu0 0.0
    %527 = vmatpush2.msra.mxu0 0.0
    %528 = vmatprep.subr.mxu0 0.0
    %529 = vmatpush2.msra.mxu0 0.0
    %530 = vmatprep.subr.mxu0 0.0
    %531 = vmatpush2.msra.mxu0 0.0
    %532 = vmatprep.subr.mxu0 0.0
    %533 = vmatpush2.msra.mxu0 0.0
    %534 = vmatprep.mubr.f32.mxu0 0.0
    %535 = vmatmul.mubr.f32.gmra.mxu0 %v456
    %v536 = vpop.f32.mrf.mxu0
    %v537 = vadd.f32 %v453, %v536
    %v538 = vpop.f32.mrf.mxu0
    %539 = vmatprep.mubr.f32.mxu0 0.0
    %540 = vmatmul.mubr.f32.gmra.mxu0 %v459
    %v541 = vpop.f32.mrf.mxu0
    %v542 = vadd.f32 %v453, %v541
    %v543 = vpop.f32.mrf.mxu0
    %544 = vmatprep.mubr.f32.mxu0 0.0
    %545 = vmatmul.mubr.f32.gmra.mxu0 %v462
    %v546 = vpop.f32.mrf.mxu0
    %v547 = vadd.f32 %v453, %v546
    %v548 = vpop.f32.mrf.mxu0
    %549 = vmatprep.mubr.f32.mxu0 0.0
    %550 = vmatmul.mubr.f32.gmra.mxu0 %v465
    %v551 = vpop.f32.mrf.mxu0
    %v552 = vadd.f32 %v453, %v551
    %v553 = vpop.f32.mrf.mxu0
    %554 = vmatprep.mubr.f32.mxu0 0.0
    %555 = vmatmul.mubr.f32.gmra.mxu0 %v468
    %v556 = vpop.f32.mrf.mxu0
    %v557 = vadd.f32 %v453, %v556
    %v558 = vpop.f32.mrf.mxu0
    %559 = vdwg.mxu0
    %vm560 = vcmask 130048
    %561 = vst.msk [vmem:[%s5] sm:$0xff] %vm560, %v537
    %562 = vst.msk [vmem:[%s5 + $0x8] sm:$0xff] %vm560, %v542
    %563 = vst.msk [vmem:[%s5 + $0x10] sm:$0xff] %vm560, %v547
    %564 = vst.msk [vmem:[%s5 + $0x18] sm:$0xff] %vm560, %v552
    %565 = vst.msk [vmem:[%s5 + $0x20] sm:$0xff] %vm560, %v557
    // Predicated region
    $region22: #{tpu_custom_call.1} parent=1 // pred_check
      _
    $region23: #{tpu_custom_call.1} parent=1 // pred_check_branch
      %567 = sbr.rel (0) target = $region25
    $region24: #{tpu_custom_call.1} parent=1 // pred_region
      _
    $region25: #{tpu_custom_call.1} parent=1 // pred_fallthru
      _
    // Predicated region
    $region26: #{tpu_custom_call.1} parent=1 // pred_check
      _
    $region27: #{tpu_custom_call.1} parent=1 // pred_check_branch
      %569 = sbr.rel (0) target = $region29
    $region28: #{tpu_custom_call.1} parent=1 // pred_region
      %s571 = ssub.s32 128, 128
      %572 = vsyncadd [#allocation4], %s571
      %s574 = sshll.u32 [#allocation3], 4
      %s575 = int_to_ptr.vmem [resolvable:$true] %s574
      %577 = dma.vmem_to_hbm [thread:$0]  %s575, 128, %s6, [#allocation4]
    $region29: #{tpu_custom_call.1} parent=1 // pred_fallthru
      _
    // Predicated region
    $region30: #{tpu_custom_call.1} parent=1 // pred_check
      _
    $region31: #{tpu_custom_call.1} parent=1 // pred_check_branch
      %579 = sbr.rel (0) target = $region33
    $region32: #{tpu_custom_call.1} parent=1 // pred_region
      _
    $region33: #{tpu_custom_call.1} parent=1 // pred_fallthru
      _
    // Predicated region
    $region34: #{tpu_custom_call.1} parent=1 // pred_check
      _
    $region35: #{tpu_custom_call.1} parent=1 // pred_check_branch
      %581 = sbr.rel (0) target = $region37
    $region36: #{tpu_custom_call.1} parent=1 // pred_region
      %582 = dma.done [#allocation4], 128
    $region37: #{tpu_custom_call.1} parent=1 // pred_fallthru
      _
    %583 = vsyncpa [#allocation4], 1

</llo_original>
